<compile_context>
chip_gen: v6e
topology: v6e:2x2x1
jax: 0.10.0
libtpu: 0.0.40
codegen_flags: <defaults>
</compile_context>

<pallas_src>
import jax
import jax.numpy as jnp
from jax.experimental import pallas as pl
from jax.experimental.pallas import tpu as pltpu


def _conv_gemm_bias_kernel(w_ref, p_ref, b_ref, o_ref):
    """Fused im2col GEMM + bias for one batch element.

    w_ref: (Cout, K)   weights reshaped to (Cout, Cin*KH*KW), K-order (cin, kh, kw)
    p_ref: (K, M)      im2col patch matrix for this batch element, M = Ho*Wo
    b_ref: (Cout, 1)   bias column
    o_ref: (Cout, M)   lane-dense output block
    """
    acc = jnp.dot(w_ref[...], p_ref[...], preferred_element_type=jnp.float32)
    # Broadcast bias add: ~a handful of vadds on the VPU, effectively free.
    o_ref[...] = (acc + b_ref[...]).astype(o_ref.dtype)


def conv2d_pallas(x_nchw, w_oihw, bias):
    """Conv2d(Cin=3, Cout=6, k=3, stride=1, pad=0) matching nn.Conv2d semantics.

    x_nchw: (N, Cin, H, W) float32
    w_oihw: (Cout, Cin, KH, KW) float32
    bias:   (Cout,) float32
    returns (N, Cout, Ho, Wo) float32
    """
    N, Cin, H, W = x_nchw.shape
    Cout, Cin_w, KH, KW = w_oihw.shape
    assert Cin == Cin_w
    Ho, Wo = H - KH + 1, W - KW + 1
    K = Cin * KH * KW              # 27
    M = Ho * Wo                    # 196 (lane dimension, >= 128)

    # ---- im2col, batch-major (no transposes) -------------------------------
    # K-axis order must match w_oihw.reshape(Cout, Cin*KH*KW): (cin, kh, kw).
    cols = []
    for kh in range(KH):
        for kw in range(KW):
            cols.append(x_nchw[:, :, kh:kh + Ho, kw:kw + Wo])    # (N, Cin, Ho, Wo)
    patches = jnp.stack(cols, axis=2)                             # (N, Cin, KH*KW, Ho, Wo)
    patches = patches.reshape(N, K, M)                            # (N, K, Ho*Wo)

    w_mat = w_oihw.reshape(Cout, K)                               # (Cout, K)
    b_col = bias.reshape(Cout, 1)                                 # (Cout, 1)

    # ---- per-batch Pallas GEMM ---------------------------------------------
    out = pl.pallas_call(
        _conv_gemm_bias_kernel,
        out_shape=jax.ShapeDtypeStruct((N, Cout, M), x_nchw.dtype),
        grid_spec=pl.GridSpec(
            grid=(N,),
            in_specs=[
                pl.BlockSpec((Cout, K), lambda n: (0, 0)),          # weights (whole, reused)
                pl.BlockSpec((None, K, M), lambda n: (n, 0, 0)),    # this batch's patches
                pl.BlockSpec((Cout, 1), lambda n: (0, 0)),          # bias (whole, reused)
            ],
            out_specs=pl.BlockSpec((None, Cout, M), lambda n: (n, 0, 0)),
        ),
        compiler_params=pltpu.CompilerParams(
            dimension_semantics=("parallel",),          # v7x: batch split across 2 TCs
            allow_input_fusion=[False, True, False],    # let XLA fuse the im2col chain
        ),
        cost_estimate=pl.CostEstimate(
            flops=2 * N * Cout * K * M + N * Cout * M,
            transcendentals=0,
            bytes_accessed=4 * (Cout * K + N * K * M + Cout + N * Cout * M),
        ),
    )(w_mat, patches, b_col)                                      # (N, Cout, Ho*Wo)

    # Free metadata reshape to the PyTorch NCHW convention.
    return out.reshape(N, Cout, Ho, Wo)


def init_mini_params(key):
    """Deterministic synthetic parameters with nn.Conv2d(3, 6, 3) shapes."""
    Cout, Cin, KH, KW = 6, 3, 3, 3
    k_w, k_b = jax.random.split(key)
    fan_in = Cin * KH * KW
    bound = 1.0 / (fan_in ** 0.5)   # matches PyTorch's uniform init bound scale
    w = jax.random.uniform(k_w, (Cout, Cin, KH, KW), jnp.float32, -bound, bound)
    b = jax.random.uniform(k_b, (Cout,), jnp.float32, -bound, bound)
    return w, b


if __name__ == "__main__":
    key = jax.random.PRNGKey(0)
    k_x, k_p = jax.random.split(key)

    # Small NCHW input consistent with Conv2d(3, 6, 3): (N=2, C=3, H=16, W=16).
    x = jax.random.normal(k_x, (2, 3, 16, 16), jnp.float32)
    w, b = init_mini_params(k_p)

    out = conv2d_pallas(x, w, b)
    out = jax.block_until_ready(out)

    # Sanity check against the pure-JAX reference convolution.  Tolerance is
    # loose enough to absorb reduced-precision MXU passes for f32 inputs while
    # still catching any layout / indexing / semantics bug (those are O(1)).
    ref = jax.lax.conv_general_dilated(
        x, w, window_strides=(1, 1), padding="VALID",
        dimension_numbers=("NCHW", "OIHW", "NCHW"),
        precision=jax.lax.Precision.HIGHEST,
    ) + b.reshape(1, -1, 1, 1)
    assert out.shape == (2, 6, 14, 14), out.shape
    assert jnp.allclose(out, ref, atol=5e-3, rtol=5e-3), "mismatch vs reference"

    print("KERNEL_OK")
</pallas_src>

<mosaic_0001>
module attributes {stable_mosaic.version = 11 : i64} {
  func.func @_conv_gemm_bias_kernel(%arg0: i32, %arg1: memref<6x27xf32, #tpu.memory_space<vmem>>, %arg2: memref<1x27x196xf32, #tpu.memory_space<vmem>>, %arg3: memref<6x1xf32, #tpu.memory_space<vmem>>, %arg4: memref<1x6x196xf32, #tpu.memory_space<vmem>>) attributes {dimension_semantics = [#tpu.dimension_semantics<parallel>], iteration_bounds = array<i64: 2>, scalar_prefetch = 0 : i64, scratch_operands = 0 : i64, tpu.core_type = #tpu.core_type<tc>, window_params = [{pipeline_mode = #tpu.pipeline_mode<synchronous>, transform_indices = @transform_0, window_bounds = array<i64: 6, 27>}, {transform_indices = @transform_1, window_bounds = array<i64: 1, 27, 196>}, {pipeline_mode = #tpu.pipeline_mode<synchronous>, transform_indices = @transform_2, window_bounds = array<i64: 6, 1>}, {transform_indices = @transform_3, window_bounds = array<i64: 1, 6, 196>}]} {
    %c0 = arith.constant 0 : index
    %c0_0 = arith.constant 0 : index
    %0 = vector.load %arg1[%c0, %c0_0] : memref<6x27xf32, #tpu.memory_space<vmem>>, vector<6x27xf32>
    %c0_1 = arith.constant 0 : index
    %c0_2 = arith.constant 0 : index
    %c0_3 = arith.constant 0 : index
    %1 = vector.load %arg2[%c0_1, %c0_2, %c0_3] : memref<1x27x196xf32, #tpu.memory_space<vmem>>, vector<1x27x196xf32>
    %2 = vector.shape_cast %1 : vector<1x27x196xf32> to vector<27x196xf32>
    %cst = arith.constant dense<0.000000e+00> : vector<6x196xf32>
    %3 = tpu.matmul %0, %2, %cst {dimension_numbers = #tpu.dot_dimension_numbers<[1], [0], [0], [1], [0, 0, 1, 1], [], []>} : vector<6x27xf32>, vector<27x196xf32>, vector<6x196xf32> -> vector<6x196xf32>
    %c0_4 = arith.constant 0 : index
    %c0_5 = arith.constant 0 : index
    %4 = vector.load %arg3[%c0_4, %c0_5] : memref<6x1xf32, #tpu.memory_space<vmem>>, vector<6x1xf32>
    %5 = vector.broadcast %4 : vector<6x1xf32> to vector<6x196xf32>
    %6 = arith.addf %3, %5 : vector<6x196xf32>
    %c0_6 = arith.constant 0 : index
    %c0_7 = arith.constant 0 : index
    %c0_8 = arith.constant 0 : index
    %7 = vector.load %arg4[%c0_6, %c0_7, %c0_8] : memref<1x6x196xf32, #tpu.memory_space<vmem>>, vector<1x6x196xf32>
    %8 = vector.shape_cast %7 : vector<1x6x196xf32> to vector<6x196xf32>
    %9 = vector.shape_cast %6 : vector<6x196xf32> to vector<1x6x196xf32>
    tpu.vector_store %arg4[%c0_6, %c0_7, %c0_8], %9 {strides = array<i32>} : memref<1x6x196xf32, #tpu.memory_space<vmem>>, vector<1x6x196xf32>,
    return
  }
  func.func @transform_0(%arg0: i32) -> (i32, i32) {
    %c0_i32 = arith.constant 0 : i32
    %c0_i32_0 = arith.constant 0 : i32
    %c0_i32_1 = arith.constant 0 : i32
    return %c0_i32, %c0_i32_0 : i32, i32
  }
  func.func @transform_1(%arg0: i32) -> (i32, i32, i32) {
    %c0_i32 = arith.constant 0 : i32
    %c0_i32_0 = arith.constant 0 : i32
    %c0_i32_1 = arith.constant 0 : i32
    return %arg0, %c0_i32, %c0_i32_0 : i32, i32, i32
  }
  func.func @transform_2(%arg0: i32) -> (i32, i32) {
    %c0_i32 = arith.constant 0 : i32
    %c0_i32_0 = arith.constant 0 : i32
    %c0_i32_1 = arith.constant 0 : i32
    return %c0_i32, %c0_i32_0 : i32, i32
  }
  func.func @transform_3(%arg0: i32) -> (i32, i32, i32) {
    %c0_i32 = arith.constant 0 : i32
    %c0_i32_0 = arith.constant 0 : i32
    %c0_i32_1 = arith.constant 0 : i32
    return %arg0, %c0_i32, %c0_i32_0 : i32, i32, i32
  }
}

</mosaic_0001>

<llo_original>
// kernel: tpu_custom_call.1
$region0: #{tpu_custom_call.1}
  #allocation0 [shape = 'u32[]', space=smem, size = 0x4, offset = 0x4, fixed_abs, tag = 'smem constant byte address 0x4 - core index']
  #allocation1 [shape = 'u32[144,128]{1,0:T(1,128)}', space=vmem, size = 0x12000, scoped, tag = 'internal scratch']
  %s0 = inlined_call_operand.vmem [shape: f32[6,27], index: 0, kind: input, shape index: {}]
  %s1 = inlined_call_operand.vmem [shape: f32[2,27,196], index: 1, kind: input, shape index: {}]
  %s2 = inlined_call_operand.vmem [shape: f32[6,1], index: 2, kind: input, shape index: {}]
  %s3 = inlined_call_operand.vmem [shape: f32[2,6,196], index: 3, kind: output, shape index: {}]
  %s4 = sld [smem:[#allocation0]]
  $region45: #{tpu_custom_call.1} parent=0
    _
  %s6 = ssub.s32 1, %s4
  %s7 = scalar_select 0, %s6, %s4
  loop: start=0, step=1, limit=4
  $region2: #{tpu_custom_call.1} parent=0 // loop_pre_header
    _
  $region3: #{tpu_custom_call.1} parent=0 // loop_header
    %s9 = sphi 0, %s13
    %p10 = scmp.ge.s32.totalorder %s9, 4
    %s17 = sphi 0, %s17
    %s19 = sphi 0, %s17
    %s20 = sphi 0, %s19
    %s34 = sphi 0, %s20
    %s40 = sphi 0, %s42
    %s43 = sphi 0, %s40
    %s44 = sphi 0, %s43
    %s60 = sphi 0, %s44
    %s64 = sphi 0, %s64
    %s66 = sphi 0, %s64
    %s67 = sphi 0, %s66
    %s81 = sphi 0, %s67
    %s87 = sphi 0, %s89
    %s90 = sphi 0, %s87
    %s91 = sphi 0, %s90
    %s107 = sphi 0, %s91
  $region4: #{tpu_custom_call.1} parent=0 // loop_header_branch
    %12 = sbr.rel (%p10) target = $region8
  $region5: #{tpu_custom_call.1} parent=0 // loop_body
    %s14 = ssub.s32 %s9, 1
    %s15 = ssub.s32 %s9, 2
    %s16 = sadd.s32 %s9, 1
    %s18 = sadd.s32 %s17, 1
    %p21 = scmp.eq.s32.totalorder %s9, 1
    %p22 = scmp.ne.s32.totalorder %s17, %s19
    %p23 = scmp.eq.s32.totalorder %s9, 0
    %p24 = por %p22, %p23
    %p25 = scmp.ne.s32.totalorder %s17, %s19
    %p26 = scmp.eq.s32.totalorder %s14, 1
    %p27 = por %p25, %p26
    %p28 = scmp.ne.s32.totalorder %s19, %s20
    %p29 = scmp.eq.s32.totalorder %s14, 0
    %p30 = por %p28, %p29
    %p31 = scmp.ne.s32.totalorder %s19, %s20
    %p32 = scmp.eq.s32.totalorder %s15, 1
    %p33 = por %p31, %p32
    %p35 = scmp.ne.s32.totalorder %s20, %s34
    %p36 = scmp.eq.s32.totalorder %s15, 0
    %p37 = por %p35, %p36
    %s38 = ssub.s32 %s9, %s16
    %p39 = scmp.eq.s32.totalorder %s38, 0
    %s41 = sadd.s32 %s40, 1
    %s42 = scalar_select %p39, %s40, %s41
    %p45 = pneg %p39
    %p46 = scmp.eq.s32.totalorder %s9, 1
    %p47 = por %p45, %p46
    %p48 = scmp.ne.s32.totalorder %s40, %s43
    %p49 = scmp.eq.s32.totalorder %s9, 0
    %p50 = por %p48, %p49
    %p51 = scmp.ne.s32.totalorder %s40, %s43
    %p52 = scmp.eq.s32.totalorder %s14, 1
    %p53 = por %p51, %p52
    %p54 = scmp.ne.s32.totalorder %s43, %s44
    %p55 = scmp.eq.s32.totalorder %s14, 0
    %p56 = por %p54, %p55
    %p57 = scmp.ne.s32.totalorder %s43, %s44
    %p58 = scmp.eq.s32.totalorder %s15, 1
    %p59 = por %p57, %p58
    %p61 = scmp.ne.s32.totalorder %s44, %s60
    %p62 = scmp.eq.s32.totalorder %s15, 0
    %p63 = por %p61, %p62
    %s65 = sadd.s32 %s64, 1
    %p68 = scmp.eq.s32.totalorder %s9, 1
    %p69 = scmp.ne.s32.totalorder %s64, %s66
    %p70 = scmp.eq.s32.totalorder %s9, 0
    %p71 = por %p69, %p70
    %p72 = scmp.ne.s32.totalorder %s64, %s66
    %p73 = scmp.eq.s32.totalorder %s14, 1
    %p74 = por %p72, %p73
    %p75 = scmp.ne.s32.totalorder %s66, %s67
    %p76 = scmp.eq.s32.totalorder %s14, 0
    %p77 = por %p75, %p76
    %p78 = scmp.ne.s32.totalorder %s66, %s67
    %p79 = scmp.eq.s32.totalorder %s15, 1
    %p80 = por %p78, %p79
    %p82 = scmp.ne.s32.totalorder %s67, %s81
    %p83 = scmp.eq.s32.totalorder %s15, 0
    %p84 = por %p82, %p83
    %s85 = ssub.s32 %s9, %s16
    %p86 = scmp.eq.s32.totalorder %s85, 0
    %s88 = sadd.s32 %s87, 1
    %s89 = scalar_select %p86, %s87, %s88
    %p92 = pneg %p86
    %p93 = scmp.eq.s32.totalorder %s9, 1
    %p94 = por %p92, %p93
    %p95 = scmp.ne.s32.totalorder %s87, %s90
    %p96 = scmp.eq.s32.totalorder %s9, 0
    %p97 = por %p95, %p96
    %p98 = scmp.ne.s32.totalorder %s87, %s90
    %p99 = scmp.eq.s32.totalorder %s14, 1
    %p100 = por %p98, %p99
    %p101 = scmp.ne.s32.totalorder %s90, %s91
    %p102 = scmp.eq.s32.totalorder %s14, 0
    %p103 = por %p101, %p102
    %p104 = scmp.ne.s32.totalorder %s90, %s91
    %p105 = scmp.eq.s32.totalorder %s15, 1
    %p106 = por %p104, %p105
    %p108 = scmp.ne.s32.totalorder %s91, %s107
    %p109 = scmp.eq.s32.totalorder %s15, 0
    %p110 = por %p108, %p109
    %p111 = scmp.le.s32.totalorder 1, %s9
    %p112 = scmp.lt.s32.totalorder %s9, 3
    %p113 = pnand %p111, %p112
    %p114 = pneg %p113
    // Predicated region
    $region9: #{tpu_custom_call.1} parent=5 // pred_check
      _
    $region10: #{tpu_custom_call.1} parent=5 // pred_check_branch
      %116 = sbr.rel (%p113) target = $region12
    $region11: #{tpu_custom_call.1} parent=5 // pred_region
      %s117 = ssub.s32 %s9, 1
      // Predicated region
      $region13: #{tpu_custom_call.1} parent=11 // pred_check
        %p118 = pneg %p30
      $region14: #{tpu_custom_call.1} parent=11 // pred_check_branch
        %120 = sbr.rel (%p118) target = $region16
      $region15: #{tpu_custom_call.1} parent=11 // pred_region
        _
      $region16: #{tpu_custom_call.1} parent=11 // pred_fallthru
        _
      // Predicated region
      $region17: #{tpu_custom_call.1} parent=11 // pred_check
        %p121 = pneg %p77
      $region18: #{tpu_custom_call.1} parent=11 // pred_check_branch
        %123 = sbr.rel (%p121) target = $region20
      $region19: #{tpu_custom_call.1} parent=11 // pred_region
        _
      $region20: #{tpu_custom_call.1} parent=11 // pred_fallthru
        _
    $region12: #{tpu_custom_call.1} parent=5 // pred_fallthru
      _
    %p124 = scmp.lt.s32.totalorder %s9, 2
    // Predicated region
    $region21: #{tpu_custom_call.1} parent=5 // pred_check
      %p125 = pneg %p124
    $region22: #{tpu_custom_call.1} parent=5 // pred_check_branch
      %127 = sbr.rel (%p125) target = $region24
    $region23: #{tpu_custom_call.1} parent=5 // pred_region
      // Predicated region
      $region25: #{tpu_custom_call.1} parent=23 // pred_check
        %p128 = pneg %p50
      $region26: #{tpu_custom_call.1} parent=23 // pred_check_branch
        %130 = sbr.rel (%p128) target = $region28
      $region27: #{tpu_custom_call.1} parent=23 // pred_region
        %p131 = scmp.lt.s32.totalorder %s9, 1
        %s132 = scalar_select %p131, %s9, 1
        %s133 = smul.addr %s132, 8
        %s134 = smul.addr %s133, 8
        %s135 = scalar_lea.vmem %s1, %s134
      $region28: #{tpu_custom_call.1} parent=23 // pred_fallthru
        _
    $region24: #{tpu_custom_call.1} parent=5 // pred_fallthru
      _
    %p136 = scmp.le.s32.totalorder 1, %s9
    %p137 = scmp.lt.s32.totalorder %s9, 3
    %p138 = pnand %p136, %p137
    %p139 = pneg %p138
    // Predicated region
    $region29: #{tpu_custom_call.1} parent=5 // pred_check
      _
    $region30: #{tpu_custom_call.1} parent=5 // pred_check_branch
      %141 = sbr.rel (%p138) target = $region32
    $region31: #{tpu_custom_call.1} parent=5 // pred_region
      %s142 = ssub.s32 %s9, 1
      %p143 = pneg %p30
      %p144 = pneg %p27
      %p145 = scmp.lt.s32.totalorder %s14, 1
      %s146 = scalar_select %p145, %s14, 1
      %s147 = smul.addr %s146, 8
      %s148 = smul.addr %s147, 8
      %s149 = scalar_lea.vmem %s1, %s148
      %p150 = pneg %p56
      %p151 = pneg %p53
      %p152 = pneg %p77
      %p153 = pneg %p74
      %p154 = pneg %p103
      %p155 = pneg %p100
      %p156 = scmp.lt.s32.totalorder %s14, 1
      %s157 = scalar_select %p156, %s14, 1
      %s158 = smul.addr %s157, 2
      %s159 = smul.addr %s158, 8
      %s160 = scalar_lea.vmem %s3, %s159
      %p161 = scmp.lt.s32.totalorder %s14, 1
      %s162 = scalar_select %p161, %s14, 1
      %s163 = smul.addr %s162, 8
      %s164 = smul.addr %s163, 8
      %s165 = scalar_lea.vmem %s1, %s164
      %p166 = scmp.lt.s32.totalorder %s14, 1
      %s167 = scalar_select %p166, %s14, 1
      %s168 = smul.addr %s167, 2
      %s169 = smul.addr %s168, 8
      %s170 = scalar_lea.vmem %s3, %s169
      %v171 = vld [vmem:[%s0] sm:$0x3f]
      %v172 = vld [vmem:[%s165] sm:$0xff]
      %v173 = vld [vmem:[%s165 + $0x8] sm:$0xff]
      %v174 = vld [vmem:[%s165 + $0x10] sm:$0xff]
      %v175 = vld [vmem:[%s165 + $0x18] sm:$0xff]
      %v176 = vld [vmem:[%s165 + $0x20] sm:$0xff]
      %v177 = vld [vmem:[%s165 + $0x28] sm:$0xff]
      %v178 = vld [vmem:[%s165 + $0x30] sm:$0x7]
      %v179 = vld [vmem:[%s165 + $0x38] sm:$0x7]
      %v180 = vld [vmem:[%s2] sm:$0x3f]
      %182 = vset.pattern.permute.xlu0 0
      %183 = vperm.xlu0 %182, %v180
      %v184 = vpop.permute.xlu0 %183
      %vm186 = vcmask 220160
      %v188 = vsel %vm186, %v171, 0
      %vm190 = vcmask 1042432
      %v192 = vsel %vm190, %v178, 0
      %v195 = vsel %vm190, %v179, 0
      %197 = vmatprep.subr.mxu0 0.0
      %198 = vmatpush1.msra.mxu0 0.0
      %199 = vmatprep.subr.mxu0 0.0
      %200 = vmatpush1.msra.mxu0 0.0
      %201 = vmatprep.subr.mxu0 0.0
      %202 = vmatpush1.msra.mxu0 0.0
      %203 = vmatprep.subr.mxu0 0.0
      %204 = vmatpush1.msra.mxu0 0.0
      %205 = vmatprep.subr.mxu0 0.0
      %206 = vmatpush1.msra.mxu0 0.0
      %207 = vmatprep.subr.mxu0 0.0
      %208 = vmatpush1.msra.mxu0 0.0
      %209 = vmatprep.subr.mxu0 0.0
      %210 = vmatpush1.msra.mxu0 0.0
      %211 = vmatprep.subr.mxu0 0.0
      %212 = vmatpush1.msra.mxu0 0.0
      %213 = vmatprep.subr.mxu0 0.0
      %214 = vmatpush1.msra.mxu0 0.0
      %215 = vmatprep.subr.mxu0 0.0
      %216 = vmatpush1.msra.mxu0 0.0
      %217 = vmatprep.subr.mxu0 0.0
      %218 = vmatpush1.msra.mxu0 0.0
      %219 = vmatprep.subr.mxu0 0.0
      %220 = vmatpush1.msra.mxu0 0.0
      %221 = vmatprep.subr.mxu0 %v195
      %222 = vmatpush1.msra.mxu0 %v192
      %223 = vmatprep.subr.mxu0 %v177
      %224 = vmatpush1.msra.mxu0 %v176
      %225 = vmatprep.subr.mxu0 %v175
      %226 = vmatpush1.msra.mxu0 %v174
      %227 = vmatprep.subr.mxu0 %v173
      %228 = vmatpush1.msra.mxu0 %v172
      %229 = vmatprep.subr.mxu0 0.0
      %230 = vmatpush2.msra.mxu0 0.0
      %231 = vmatprep.subr.mxu0 0.0
      %232 = vmatpush2.msra.mxu0 0.0
      %233 = vmatprep.subr.mxu0 0.0
      %234 = vmatpush2.msra.mxu0 0.0
      %235 = vmatprep.subr.mxu0 0.0
      %236 = vmatpush2.msra.mxu0 0.0
      %237 = vmatprep.subr.mxu0 0.0
      %238 = vmatpush2.msra.mxu0 0.0
      %239 = vmatprep.subr.mxu0 0.0
      %240 = vmatpush2.msra.mxu0 0.0
      %241 = vmatprep.subr.mxu0 0.0
      %242 = vmatpush2.msra.mxu0 0.0
      %243 = vmatprep.subr.mxu0 0.0
      %244 = vmatpush2.msra.mxu0 0.0
      %245 = vmatprep.subr.mxu0 0.0
      %246 = vmatpush2.msra.mxu0 0.0
      %247 = vmatprep.subr.mxu0 0.0
      %248 = vmatpush2.msra.mxu0 0.0
      %249 = vmatprep.subr.mxu0 0.0
      %250 = vmatpush2.msra.mxu0 0.0
      %251 = vmatprep.subr.mxu0 0.0
      %252 = vmatpush2.msra.mxu0 0.0
      %253 = vmatprep.subr.mxu0 0.0
      %254 = vmatpush2.msra.mxu0 0.0
      %255 = vmatprep.subr.mxu0 0.0
      %256 = vmatpush2.msra.mxu0 0.0
      %257 = vmatprep.subr.mxu0 0.0
      %258 = vmatpush2.msra.mxu0 0.0
      %259 = vmatprep.subr.mxu0 0.0
      %260 = vmatpush2.msra.mxu0 0.0
      %261 = vmatprep.mubr.f32.mxu0 0.0
      %262 = vmatmul.mubr.f32.gmra.mxu0 %v188
      %v263 = vpop.f32.mrf.mxu0
      %v264 = vadd.f32 %v184, %v263
      %v265 = vpop.f32.mrf.mxu0
      %v266 = vadd.f32 %v184, %v265
      %267 = vdwg.mxu0
      %268 = vst [vmem:[%s170] sm:$0x3f] %v264
      %vm269 = vcmask 553984
      %270 = vst.msk [vmem:[%s170 + $0x8] sm:$0x3f] %vm269, %v266
      %p271 = scmp.lt.s32.totalorder %s14, 1
      %s272 = scalar_select %p271, %s14, 1
      %s273 = smul.addr %s272, 2
      %s274 = smul.addr %s273, 8
      %s275 = scalar_lea.vmem %s3, %s274
      // Predicated region
      $region33: #{tpu_custom_call.1} parent=31 // pred_check
        %p276 = pneg %p100
      $region34: #{tpu_custom_call.1} parent=31 // pred_check_branch
        %278 = sbr.rel (%p276) target = $region36
      $region35: #{tpu_custom_call.1} parent=31 // pred_region
        _
      $region36: #{tpu_custom_call.1} parent=31 // pred_fallthru
        _
    $region32: #{tpu_custom_call.1} parent=5 // pred_fallthru
      _
    %p279 = scmp.le.s32.totalorder 2, %s9
    // Predicated region
    $region37: #{tpu_custom_call.1} parent=5 // pred_check
      %p280 = pneg %p279
    $region38: #{tpu_custom_call.1} parent=5 // pred_check_branch
      %282 = sbr.rel (%p280) target = $region40
    $region39: #{tpu_custom_call.1} parent=5 // pred_region
      %s283 = ssub.s32 %s9, 2
      // Predicated region
      $region41: #{tpu_custom_call.1} parent=39 // pred_check
        %p284 = pneg %p106
      $region42: #{tpu_custom_call.1} parent=39 // pred_check_branch
        %286 = sbr.rel (%p284) target = $region44
      $region43: #{tpu_custom_call.1} parent=39 // pred_region
        %p287 = scmp.lt.s32.totalorder %s15, 1
        %s288 = scalar_select %p287, %s15, 1
        %s289 = smul.addr %s288, 2
        %s290 = smul.addr %s289, 8
        %s291 = scalar_lea.vmem %s3, %s290
      $region44: #{tpu_custom_call.1} parent=39 // pred_fallthru
        _
    $region40: #{tpu_custom_call.1} parent=5 // pred_fallthru
      _
  $region6: #{tpu_custom_call.1} parent=0 // loop_footer
    %s13 = sadd.s32 1, %s9
  $region7: #{tpu_custom_call.1} parent=0 // loop_footer_branch
    %8 = sbr.rel target = $region3
  $region8: #{tpu_custom_call.1} parent=0 // loop_exit
    _

</llo_original>
